<compile_context>
chip_gen: v7x
topology: tpu7x:2x2x1
jax: 0.10.0
libtpu: 0.0.40
codegen_flags: <defaults>
</compile_context>

<pallas_src>
import jax
import jax.numpy as jnp
from jax.experimental import pallas as pl
from jax.experimental.pallas import tpu as pltpu

_MiB = 1024 * 1024


def _ceil_to(x, m):
    return ((x + m - 1) // m) * m


def _lora_kernel(x_ref, a_ref, b_ref, o_ref, xa_ref):
    # x_ref: (tm, in_features); a_ref: (in_features, rank); b_ref: (rank, tn)
    # o_ref: (tm, tn); xa_ref: (tm, rank) f32 scratch, persists across the j axis.
    @pl.when(pl.program_id(1) == 0)
    def _():
        xa_ref[...] = jnp.dot(x_ref[...], a_ref[...].astype(x_ref.dtype),
                              preferred_element_type=jnp.float32)

    # Keep xa in f32 for the second (rank-sized) contraction; alpha is already
    # folded into b_ref by the wrapper.
    y = jnp.dot(xa_ref[...], b_ref[...].astype(jnp.float32),
                preferred_element_type=jnp.float32)
    o_ref[...] = y.astype(o_ref.dtype)


def _tpu_vmem_profile():
    """Returns (vmem_limit_bytes, vmem_budget_bytes, assume_two_tensorcores)."""
    try:
        cap = int(pltpu.get_tpu_info().vmem_capacity_bytes)
    except Exception:
        cap = 128 * _MiB
    if cap <= 64 * _MiB:
        # v7x-class: 64 MiB per TensorCore, 2 TensorCores per chip.
        return 48 * _MiB, 40 * _MiB, True
    # v5e / v6e: 128 MiB per TensorCore, single TensorCore.
    return 110 * _MiB, 96 * _MiB, False


def _block_spec(shape, index_map, buffer_count=None):
    """BlockSpec with optional pipeline depth; falls back if kwarg unsupported."""
    if buffer_count is not None:
        try:
            return pl.BlockSpec(shape, index_map,
                                pipeline_mode=pl.Buffered(buffer_count))
        except Exception:
            pass
    return pl.BlockSpec(shape, index_map)


def _pick_tm(in_features, rank, tn, x_itemsize, ab_itemsize, out_itemsize,
             vmem_budget_bytes):
    """Largest row tile whose buffers + resident A fit the VMEM budget."""
    # A is resident and single-buffered; it still occupies 128 lanes per sublane row.
    a_bytes = _ceil_to(in_features, 8) * _ceil_to(rank, 128) * ab_itemsize
    # B column tile (rank, tn), default double-buffered (tiny).
    b_bytes = 2 * _ceil_to(rank, 8) * tn * ab_itemsize
    remaining = max(vmem_budget_bytes - a_bytes - b_bytes, 0)
    per_row = (2 * _ceil_to(in_features, 128) * x_itemsize   # x tile, dbl-buffered
               + 2 * tn * out_itemsize                        # out tile, dbl-buffered
               + _ceil_to(rank, 128) * 4)                     # xa f32 scratch
    tm = remaining // max(per_row, 1)
    if tm >= 256:
        tm = (tm // 128) * 128   # multiples of 128 suit both 128- and 256-wide MXUs
    else:
        tm = (tm // 8) * 8
    return int(max(8, min(tm, 1024)))


def lora_forward(x, A, B, alpha=16.0, *, tm=None, tn=None, compute_dtype=None,
                 trim_output=True):
    M, in_features = x.shape
    rank, out_features = B.shape
    assert A.shape == (in_features, rank)

    out_dtype = x.dtype
    vmem_limit, vmem_budget, two_tc = _tpu_vmem_profile()

    # Fold alpha into B (rank x out multiply, negligible) -> no per-tile VPU multiply.
    B_scaled = jnp.asarray(alpha, jnp.float32) * B.astype(jnp.float32)

    # x keeps its incoming dtype (no wrapper HBM pass); compute_dtype only
    # touches the tiny A / alpha*B operands.
    ab_dtype = compute_dtype if compute_dtype is not None else x.dtype
    A_c = A.astype(ab_dtype)
    B_c = B_scaled.astype(ab_dtype)

    # Lane-dense output: pad out_features to a multiple of 128 with zero columns of B.
    out_padded = _ceil_to(out_features, 128)
    if out_padded != out_features:
        B_c = jnp.pad(B_c, ((0, 0), (0, out_padded - out_features)))

    # Out-feature tile: decouples per-step VMEM from out_features.
    if tn is None:
        tn = min(out_padded, 512)
    tn = min(_ceil_to(tn, 128), out_padded)

    x_itemsize = jnp.dtype(x.dtype).itemsize
    ab_itemsize = jnp.dtype(ab_dtype).itemsize
    out_itemsize = jnp.dtype(out_dtype).itemsize

    # Row tile sized to the generation-aware VMEM budget.
    if tm is None:
        tm = _pick_tm(in_features, rank, tn, x_itemsize, ab_itemsize,
                      out_itemsize, vmem_budget)
    if two_tc and M >= 256:
        # Guarantee >= 2 row tiles so both v7x TensorCores get work.
        tm = min(tm, _ceil_to(-(-M // 2), 128))
    if tm >= M:
        tm = M                       # single full-extent row block (always legal)
    else:
        tm = max(8, (tm // 8) * 8)   # partial last block is masked by Pallas

    grid = (pl.cdiv(M, tm), pl.cdiv(out_padded, tn))

    flops = 2 * M * in_features * rank + 2 * M * rank * out_padded
    bytes_accessed = (M * in_features * x_itemsize
                      + in_features * rank * ab_itemsize
                      + rank * out_padded * ab_itemsize
                      + M * out_padded * out_itemsize)
    cost = pl.CostEstimate(flops=flops, transcendentals=0,
                           bytes_accessed=bytes_accessed)

    out = pl.pallas_call(
        _lora_kernel,
        out_shape=jax.ShapeDtypeStruct((M, out_padded), out_dtype),
        grid_spec=pltpu.PrefetchScalarGridSpec(
            num_scalar_prefetch=0,
            grid=grid,
            in_specs=[
                pl.BlockSpec((tm, in_features), lambda i, j: (i, 0)),   # x row tile (const in j)
                _block_spec((in_features, rank), lambda i, j: (0, 0),
                            buffer_count=1),                            # A, resident
                pl.BlockSpec((rank, tn), lambda i, j: (0, j)),          # alpha*B column tile
            ],
            out_specs=pl.BlockSpec((tm, tn), lambda i, j: (i, j)),
            scratch_shapes=[pltpu.VMEM((tm, rank), jnp.float32)],       # cached xa
        ),
        compiler_params=pltpu.CompilerParams(
            dimension_semantics=("parallel", "arbitrary"),  # row tiles shard across v7x TCs
            vmem_limit_bytes=vmem_limit,
        ),
        cost_estimate=cost,
    )(x, A_c, B_c)

    if trim_output and out_padded != out_features:
        # TODO(synk): consumers that tolerate lane-padded width should pass
        # trim_output=False to skip this extra HBM pass over the result.
        out = out[:, :out_features]
    return out


if __name__ == "__main__":
    # Small, module-consistent shapes: batch=8 rows, in_features=32, out_features=64, rank=4.
    M, in_features, out_features, rank = 8, 32, 64, 4
    alpha = 16.0

    key = jax.random.PRNGKey(0)
    kx, ka, kb = jax.random.split(key, 3)

    x = jax.random.normal(kx, (M, in_features), dtype=jnp.float32)

    # Deterministic init mirroring the PyTorch __init__:
    #   A = randn(in_features, rank) * 1/sqrt(rank);  B = zeros(rank, out_features)
    std_dev = 1.0 / jnp.sqrt(jnp.float32(rank))
    A = jax.random.normal(ka, (in_features, rank), dtype=jnp.float32) * std_dev
    B = jnp.zeros((rank, out_features), dtype=jnp.float32)

    # Module-faithful init (B = 0).
    out = jax.block_until_ready(lora_forward(x, A, B, alpha))
    ref = alpha * (x @ A @ B)
    assert out.shape == (M, out_features)
    assert jnp.allclose(out, ref, atol=1e-5, rtol=1e-5)

    # Non-zero B so the xa @ B path and the alpha scaling are actually exercised.
    B_nz = jax.random.normal(kb, (rank, out_features), dtype=jnp.float32)
    out_nz = jax.block_until_ready(lora_forward(x, A, B_nz, alpha))
    ref_nz = alpha * (x @ A @ B_nz)
    assert jnp.allclose(out_nz, ref_nz, atol=1e-4, rtol=1e-4)

    print("KERNEL_OK")
</pallas_src>

<mosaic_0001>
module attributes {stable_mosaic.version = 11 : i64} {
  func.func @_lora_kernel(%arg0: i32, %arg1: i32, %arg2: memref<8x32xf32, #tpu.memory_space<vmem>>, %arg3: memref<32x4xf32, #tpu.memory_space<vmem>>, %arg4: memref<4x128xf32, #tpu.memory_space<vmem>>, %arg5: memref<8x128xf32, #tpu.memory_space<vmem>>, %arg6: memref<8x4xf32, #tpu.memory_space<vmem>>) attributes {dimension_semantics = [#tpu.dimension_semantics<parallel>, #tpu.dimension_semantics<arbitrary>], iteration_bounds = array<i64: 1, 1>, scalar_prefetch = 0 : i64, scratch_operands = 1 : i64, tpu.core_type = #tpu.core_type<tc>, window_params = [{transform_indices = @transform_0, window_bounds = array<i64: 8, 32>}, {pipeline_mode = #tpu.pipeline_mode<synchronous>, transform_indices = @transform_1, window_bounds = array<i64: 32, 4>}, {transform_indices = @transform_2, window_bounds = array<i64: 4, 128>}, {transform_indices = @transform_3, window_bounds = array<i64: 8, 128>}]} {
    %c0_i32 = arith.constant 0 : i32
    %0 = arith.cmpi eq, %arg1, %c0_i32 : i32
    %1 = arith.extui %0 : i1 to i32
    %c0_i32_0 = arith.constant 0 : i32
    %2 = arith.cmpi ne, %1, %c0_i32_0 : i32
    scf.if %2 {
      %c0_6 = arith.constant 0 : index
      %c0_7 = arith.constant 0 : index
      %7 = vector.load %arg2[%c0_6, %c0_7] : memref<8x32xf32, #tpu.memory_space<vmem>>, vector<8x32xf32>
      %c0_8 = arith.constant 0 : index
      %c0_9 = arith.constant 0 : index
      %8 = vector.load %arg3[%c0_8, %c0_9] : memref<32x4xf32, #tpu.memory_space<vmem>>, vector<32x4xf32>
      %cst_10 = arith.constant dense<0.000000e+00> : vector<8x4xf32>
      %9 = tpu.matmul %7, %8, %cst_10 {dimension_numbers = #tpu.dot_dimension_numbers<[1], [0], [0], [1], [0, 0, 1, 1], [], []>} : vector<8x32xf32>, vector<32x4xf32>, vector<8x4xf32> -> vector<8x4xf32>
      %c0_11 = arith.constant 0 : index
      %c0_12 = arith.constant 0 : index
      %10 = vector.load %arg6[%c0_11, %c0_12] : memref<8x4xf32, #tpu.memory_space<vmem>>, vector<8x4xf32>
      tpu.vector_store %arg6[%c0_11, %c0_12], %9 {strides = array<i32>} : memref<8x4xf32, #tpu.memory_space<vmem>>, vector<8x4xf32>,
    } else {
    }
    %c0 = arith.constant 0 : index
    %c0_1 = arith.constant 0 : index
    %3 = vector.load %arg6[%c0, %c0_1] : memref<8x4xf32, #tpu.memory_space<vmem>>, vector<8x4xf32>
    %c0_2 = arith.constant 0 : index
    %c0_3 = arith.constant 0 : index
    %4 = vector.load %arg4[%c0_2, %c0_3] : memref<4x128xf32, #tpu.memory_space<vmem>>, vector<4x128xf32>
    %cst = arith.constant dense<0.000000e+00> : vector<8x128xf32>
    %5 = tpu.matmul %3, %4, %cst {dimension_numbers = #tpu.dot_dimension_numbers<[1], [0], [0], [1], [0, 0, 1, 1], [], []>} : vector<8x4xf32>, vector<4x128xf32>, vector<8x128xf32> -> vector<8x128xf32>
    %c0_4 = arith.constant 0 : index
    %c0_5 = arith.constant 0 : index
    %6 = vector.load %arg5[%c0_4, %c0_5] : memref<8x128xf32, #tpu.memory_space<vmem>>, vector<8x128xf32>
    tpu.vector_store %arg5[%c0_4, %c0_5], %5 {strides = array<i32>} : memref<8x128xf32, #tpu.memory_space<vmem>>, vector<8x128xf32>,
    return
  }
  func.func @transform_0(%arg0: i32, %arg1: i32) -> (i32, i32) {
    %c0_i32 = arith.constant 0 : i32
    %c0_i32_0 = arith.constant 0 : i32
    return %arg0, %c0_i32 : i32, i32
  }
  func.func @transform_1(%arg0: i32, %arg1: i32) -> (i32, i32) {
    %c0_i32 = arith.constant 0 : i32
    %c0_i32_0 = arith.constant 0 : i32
    %c0_i32_1 = arith.constant 0 : i32
    return %c0_i32, %c0_i32_0 : i32, i32
  }
  func.func @transform_2(%arg0: i32, %arg1: i32) -> (i32, i32) {
    %c0_i32 = arith.constant 0 : i32
    %c0_i32_0 = arith.constant 0 : i32
    return %c0_i32, %arg1 : i32, i32
  }
  func.func @transform_3(%arg0: i32, %arg1: i32) -> (i32, i32) {
    %c0_i32 = arith.constant 0 : i32
    return %arg0, %arg1 : i32, i32
  }
}

</mosaic_0001>

<llo_original>
// kernel: tpu_custom_call.1
$region0: #{tpu_custom_call.1}
  #allocation0 [shape = 'u32[]', space=smem, size = 0x4, offset = 0x4, fixed_abs, tag = 'smem constant byte address 0x4 - core index']
  #allocation1 [shape = 'u32[144,128]{1,0:T(1,128)}', space=vmem, size = 0x12000, scoped, tag = 'internal scratch']
  #allocation2 [shape = 'f32[8,4]{1,0:T(8,128)}', space=vmem, size = 0x1000, scoped, tag = 'scratch operand']
  %s0 = inlined_call_operand.hbm [shape: f32[8,32], index: 0, kind: input, shape index: {}]
  %s1 = inlined_call_operand.hbm [shape: f32[32,4], index: 1, kind: input, shape index: {}]
  %s2 = inlined_call_operand.hbm [shape: f32[4,128], index: 2, kind: input, shape index: {}]
  %s3 = inlined_call_operand.hbm [shape: f32[8,128], index: 3, kind: output, shape index: {}]
  %s4 = sld [smem:[#allocation0]]
  $region38: #{tpu_custom_call.1} parent=0
    _
  %s6 = ssub.s32 1, %s4
  %s7 = scalar_select 0, %s6, %s4
  $region1: #{tpu_custom_call.1} parent=0
    #allocation3 [shape = 'u8[4096]{0}', space=vmem, size = 0x1000, scoped, tag = 'input window, operand 0, single buffered']
    #allocation4 [shape = 's32[1]{0}', space=sflag, size = 0x4, scoped, tag = 'scoped memory for tpu_custom_call.1']
    #allocation5 [shape = 's32[1]{0}', space=sflag, size = 0x4, scoped, tag = 'scoped memory for tpu_custom_call.1']
    #allocation6 [shape = 'u8[16384]{0}', space=vmem, size = 0x4000, scoped, tag = 'input window, operand 1, single buffered']
    #allocation7 [shape = 's32[1]{0}', space=sflag, size = 0x4, scoped, tag = 'scoped memory for tpu_custom_call.1']
    #allocation8 [shape = 'u8[2048]{0}', space=vmem, size = 0x800, scoped, tag = 'input window, operand 2, single buffered']
    #allocation9 [shape = 'u8[4096]{0}', space=vmem, size = 0x1000, scoped, tag = 'output window, operand 0, single buffered']
    %8 = vsyncpa [#allocation4], 0
    %9 = vsyncpa [#allocation7], 0
    %10 = vsyncpa [#allocation5], 0
    // Predicated region
    $region2: #{tpu_custom_call.1} parent=1 // pred_check
      _
    $region3: #{tpu_custom_call.1} parent=1 // pred_check_branch
      %12 = sbr.rel (0) target = $region5
    $region4: #{tpu_custom_call.1} parent=1 // pred_region
      %s14 = ssub.s32 128, 128
      %15 = vsyncadd [#allocation4], %s14
      %s17 = sshll.u32 [#allocation3], 4
      %s18 = int_to_ptr.vmem [resolvable:$true] %s17
      %20 = dma.hbm_to_vmem [thread:$0]  %s0, 128, %s18, [#allocation4]
    $region5: #{tpu_custom_call.1} parent=1 // pred_fallthru
      _
    // Predicated region
    $region6: #{tpu_custom_call.1} parent=1 // pred_check
      _
    $region7: #{tpu_custom_call.1} parent=1 // pred_check_branch
      %22 = sbr.rel (0) target = $region9
    $region8: #{tpu_custom_call.1} parent=1 // pred_region
      %s24 = ssub.s32 512, 512
      %25 = vsyncadd [#allocation7], %s24
      %s26 = sshll.u32 [#allocation6], 4
      %s27 = int_to_ptr.vmem [resolvable:$true] %s26
      %32 = dma.hbm_to_vmem [thread:$0]  %s1, 512, %s27, [#allocation7], 128, 128, 8
    $region9: #{tpu_custom_call.1} parent=1 // pred_fallthru
      _
    // Predicated region
    $region10: #{tpu_custom_call.1} parent=1 // pred_check
      _
    $region11: #{tpu_custom_call.1} parent=1 // pred_check_branch
      %34 = sbr.rel (0) target = $region13
    $region12: #{tpu_custom_call.1} parent=1 // pred_region
      %s36 = ssub.s32 64, 64
      %37 = vsyncadd [#allocation7], %s36
      %s39 = sshll.u32 [#allocation8], 4
      %s40 = int_to_ptr.vmem [resolvable:$true] %s39
      %42 = dma.hbm_to_vmem [thread:$0]  %s2, 64, %s40, [#allocation7]
    $region13: #{tpu_custom_call.1} parent=1 // pred_fallthru
      _
    // Predicated region
    $region14: #{tpu_custom_call.1} parent=1 // pred_check
      _
    $region15: #{tpu_custom_call.1} parent=1 // pred_check_branch
      %44 = sbr.rel (0) target = $region17
    $region16: #{tpu_custom_call.1} parent=1 // pred_region
      %45 = dma.done [#allocation4], 128
    $region17: #{tpu_custom_call.1} parent=1 // pred_fallthru
      _
    // Predicated region
    $region18: #{tpu_custom_call.1} parent=1 // pred_check
      _
    $region19: #{tpu_custom_call.1} parent=1 // pred_check_branch
      %47 = sbr.rel (0) target = $region21
    $region20: #{tpu_custom_call.1} parent=1 // pred_region
      %48 = dma.done [#allocation7], 512
    $region21: #{tpu_custom_call.1} parent=1 // pred_fallthru
      _
    // Predicated region
    $region22: #{tpu_custom_call.1} parent=1 // pred_check
      _
    $region23: #{tpu_custom_call.1} parent=1 // pred_check_branch
      %50 = sbr.rel (0) target = $region25
    $region24: #{tpu_custom_call.1} parent=1 // pred_region
      %51 = dma.done [#allocation7], 64
    $region25: #{tpu_custom_call.1} parent=1 // pred_fallthru
      _
    %p52 = scmp.eq.s32.totalorder 0, 0
    // Predicated region
    $region26: #{tpu_custom_call.1} parent=1 // pred_check
      %p53 = pneg %p52
    $region27: #{tpu_custom_call.1} parent=1 // pred_check_branch
      %55 = sbr.rel (%p53) target = $region29
    $region28: #{tpu_custom_call.1} parent=1 // pred_region
      %v56 = vld [vmem:[#allocation3] sm:$0xff]
      %v57 = vld [vmem:[#allocation6] sm:$0xff]
      %v58 = vld [vmem:[#allocation6 + $0x8] sm:$0xff]
      %v59 = vld [vmem:[#allocation6 + $0x10] sm:$0xff]
      %v60 = vld [vmem:[#allocation6 + $0x18] sm:$0xff]
      %vm61 = vcmask 261120
      %v63 = vsel %vm61, %v56, 0
      %65 = vmatprep.subr.mxu0 0.0
      %66 = vmatpush1.msra.mxu0 %v57
      %67 = vmatprep.subr.mxu0 0.0
      %68 = vmatpush1.msra.mxu0 %v58
      %69 = vmatprep.subr.mxu0 0.0
      %70 = vmatpush1.msra.mxu0 %v59
      %71 = vmatprep.subr.mxu0 0.0
      %72 = vmatpush1.msra.mxu0 %v60
      %73 = vmatprep.subr.mxu0 0.0
      %74 = vmatpush1.msra.mxu0 0.0
      %75 = vmatprep.subr.mxu0 0.0
      %76 = vmatpush1.msra.mxu0 0.0
      %77 = vmatprep.subr.mxu0 0.0
      %78 = vmatpush1.msra.mxu0 0.0
      %79 = vmatprep.subr.mxu0 0.0
      %80 = vmatpush1.msra.mxu0 0.0
      %81 = vmatprep.subr.mxu0 0.0
      %82 = vmatpush1.msra.mxu0 0.0
      %83 = vmatprep.subr.mxu0 0.0
      %84 = vmatpush1.msra.mxu0 0.0
      %85 = vmatprep.subr.mxu0 0.0
      %86 = vmatpush1.msra.mxu0 0.0
      %87 = vmatprep.subr.mxu0 0.0
      %88 = vmatpush1.msra.mxu0 0.0
      %89 = vmatprep.subr.mxu0 0.0
      %90 = vmatpush1.msra.mxu0 0.0
      %91 = vmatprep.subr.mxu0 0.0
      %92 = vmatpush1.msra.mxu0 0.0
      %93 = vmatprep.subr.mxu0 0.0
      %94 = vmatpush1.msra.mxu0 0.0
      %95 = vmatprep.subr.mxu0 0.0
      %96 = vmatpush1.msra.mxu0 0.0
      %97 = vmatprep.subr.mxu0 0.0
      %98 = vmatpush1.msra.mxu0 0.0
      %99 = vmatprep.subr.mxu0 0.0
      %100 = vmatpush1.msra.mxu0 0.0
      %101 = vmatprep.subr.mxu0 0.0
      %102 = vmatpush1.msra.mxu0 0.0
      %103 = vmatprep.subr.mxu0 0.0
      %104 = vmatpush1.msra.mxu0 0.0
      %105 = vmatprep.subr.mxu0 0.0
      %106 = vmatpush1.msra.mxu0 0.0
      %107 = vmatprep.subr.mxu0 0.0
      %108 = vmatpush1.msra.mxu0 0.0
      %109 = vmatprep.subr.mxu0 0.0
      %110 = vmatpush1.msra.mxu0 0.0
      %111 = vmatprep.subr.mxu0 0.0
      %112 = vmatpush1.msra.mxu0 0.0
      %113 = vmatprep.subr.mxu0 0.0
      %114 = vmatpush1.msra.mxu0 0.0
      %115 = vmatprep.subr.mxu0 0.0
      %116 = vmatpush1.msra.mxu0 0.0
      %117 = vmatprep.subr.mxu0 0.0
      %118 = vmatpush1.msra.mxu0 0.0
      %119 = vmatprep.subr.mxu0 0.0
      %120 = vmatpush1.msra.mxu0 0.0
      %121 = vmatprep.subr.mxu0 0.0
      %122 = vmatpush1.msra.mxu0 0.0
      %123 = vmatprep.subr.mxu0 0.0
      %124 = vmatpush1.msra.mxu0 0.0
      %125 = vmatprep.subr.mxu0 0.0
      %126 = vmatpush1.msra.mxu0 0.0
      %127 = vmatprep.subr.mxu0 0.0
      %128 = vmatpush1.msra.mxu0 0.0
      %129 = vmatprep.mubr.f32.mxu0 0.0
      %130 = vmatmul.mubr.f32.gmra.mrb[0].mxu0 %v63
      %v131 = vpop.f32.mrb[0].mxu0
      %v132 = vadd.f32 0.0, %v131
      %v133 = vpop.f32.mrb[0].mxu0
      %134 = vdwg.mxu0
      %vm135 = vcmask 31744
      %136 = vst.msk [vmem:[#allocation2] sm:$0xff] %vm135, %v132
    $region29: #{tpu_custom_call.1} parent=1 // pred_fallthru
      _
    %v137 = vld [vmem:[#allocation2] sm:$0xff]
    %v138 = vld [vmem:[#allocation8] sm:$0xf]
    %vm139 = vcmask 31744
    %v141 = vsel %vm139, %v137, 0
    %vm143 = vcmask 1043456
    %v145 = vsel %vm143, %v138, 0
    %147 = vmatprep.subr.mxu0 0.0
    %148 = vmatpush1.msra.mxu0 %v145
    %149 = vmatprep.subr.mxu0 0.0
    %150 = vmatpush1.msra.mxu0 0.0
    %151 = vmatprep.subr.mxu0 0.0
    %152 = vmatpush1.msra.mxu0 0.0
    %153 = vmatprep.subr.mxu0 0.0
    %154 = vmatpush1.msra.mxu0 0.0
    %155 = vmatprep.subr.mxu0 0.0
    %156 = vmatpush1.msra.mxu0 0.0
    %157 = vmatprep.subr.mxu0 0.0
    %158 = vmatpush1.msra.mxu0 0.0
    %159 = vmatprep.subr.mxu0 0.0
    %160 = vmatpush1.msra.mxu0 0.0
    %161 = vmatprep.subr.mxu0 0.0
    %162 = vmatpush1.msra.mxu0 0.0
    %163 = vmatprep.subr.mxu0 0.0
    %164 = vmatpush1.msra.mxu0 0.0
    %165 = vmatprep.subr.mxu0 0.0
    %166 = vmatpush1.msra.mxu0 0.0
    %167 = vmatprep.subr.mxu0 0.0
    %168 = vmatpush1.msra.mxu0 0.0
    %169 = vmatprep.subr.mxu0 0.0
    %170 = vmatpush1.msra.mxu0 0.0
    %171 = vmatprep.subr.mxu0 0.0
    %172 = vmatpush1.msra.mxu0 0.0
    %173 = vmatprep.subr.mxu0 0.0
    %174 = vmatpush1.msra.mxu0 0.0
    %175 = vmatprep.subr.mxu0 0.0
    %176 = vmatpush1.msra.mxu0 0.0
    %177 = vmatprep.subr.mxu0 0.0
    %178 = vmatpush1.msra.mxu0 0.0
    %179 = vmatprep.subr.mxu0 0.0
    %180 = vmatpush1.msra.mxu0 0.0
    %181 = vmatprep.subr.mxu0 0.0
    %182 = vmatpush1.msra.mxu0 0.0
    %183 = vmatprep.subr.mxu0 0.0
    %184 = vmatpush1.msra.mxu0 0.0
    %185 = vmatprep.subr.mxu0 0.0
    %186 = vmatpush1.msra.mxu0 0.0
    %187 = vmatprep.subr.mxu0 0.0
    %188 = vmatpush1.msra.mxu0 0.0
    %189 = vmatprep.subr.mxu0 0.0
    %190 = vmatpush1.msra.mxu0 0.0
    %191 = vmatprep.subr.mxu0 0.0
    %192 = vmatpush1.msra.mxu0 0.0
    %193 = vmatprep.subr.mxu0 0.0
    %194 = vmatpush1.msra.mxu0 0.0
    %195 = vmatprep.subr.mxu0 0.0
    %196 = vmatpush1.msra.mxu0 0.0
    %197 = vmatprep.subr.mxu0 0.0
    %198 = vmatpush1.msra.mxu0 0.0
    %199 = vmatprep.subr.mxu0 0.0
    %200 = vmatpush1.msra.mxu0 0.0
    %201 = vmatprep.subr.mxu0 0.0
    %202 = vmatpush1.msra.mxu0 0.0
    %203 = vmatprep.subr.mxu0 0.0
    %204 = vmatpush1.msra.mxu0 0.0
    %205 = vmatprep.subr.mxu0 0.0
    %206 = vmatpush1.msra.mxu0 0.0
    %207 = vmatprep.subr.mxu0 0.0
    %208 = vmatpush1.msra.mxu0 0.0
    %209 = vmatprep.subr.mxu0 0.0
    %210 = vmatpush1.msra.mxu0 0.0
    %211 = vmatprep.mubr.f32.mxu0 0.0
    %212 = vmatmul.mubr.f32.gmra.mrb[0].mxu0 %v141
    %v213 = vpop.f32.mrb[0].mxu0
    %v214 = vadd.f32 0.0, %v213
    %v215 = vpop.f32.mrb[0].mxu0
    %216 = vdwg.mxu0
    %217 = vst [vmem:[#allocation9] sm:$0xff] %v214
    // Predicated region
    $region30: #{tpu_custom_call.1} parent=1 // pred_check
      _
    $region31: #{tpu_custom_call.1} parent=1 // pred_check_branch
      %219 = sbr.rel (0) target = $region33
    $region32: #{tpu_custom_call.1} parent=1 // pred_region
      %s221 = ssub.s32 128, 128
      %222 = vsyncadd [#allocation5], %s221
      %s224 = sshll.u32 [#allocation9], 4
      %s225 = int_to_ptr.vmem [resolvable:$true] %s224
      %227 = dma.vmem_to_hbm [thread:$0]  %s225, 128, %s3, [#allocation5]
    $region33: #{tpu_custom_call.1} parent=1 // pred_fallthru
      _
    // Predicated region
    $region34: #{tpu_custom_call.1} parent=1 // pred_check
      _
    $region35: #{tpu_custom_call.1} parent=1 // pred_check_branch
      %229 = sbr.rel (0) target = $region37
    $region36: #{tpu_custom_call.1} parent=1 // pred_region
      %230 = dma.done [#allocation5], 128
    $region37: #{tpu_custom_call.1} parent=1 // pred_fallthru
      _
    %231 = vsyncpa [#allocation4], 1
    %232 = vsyncpa [#allocation7], 1
    %233 = vsyncpa [#allocation5], 1

</llo_original>
